<compile_context>
chip_gen: v7x
topology: tpu7x:2x2x1
jax: 0.10.0
libtpu: 0.0.40
codegen_flags: <defaults>
</compile_context>

<pallas_src>
import math

import jax
import jax.numpy as jnp
from jax import lax
from jax.experimental import pallas as pl
from jax.experimental.pallas import tpu as pltpu


def _round_up(a, b):
    return ((a + b - 1) // b) * b


def _cdiv(a, b):
    return -(-a // b)


def compute_gaussian_mask(mean, std, theta, H, W):
    """Plain-JAX port of GaussianReadout.compute_gaussian_mask (tiny, param-only)."""
    std = jnp.clip(std, 1e-3)                                  # clamp(min=0.001)
    gy, gx = jnp.meshgrid(jnp.arange(H, dtype=jnp.float32),
                          jnp.arange(W, dtype=jnp.float32), indexing="ij")
    grid = jnp.stack([gy, gx], axis=-1)                        # (H, W, 2)
    cos_t, sin_t = jnp.cos(theta), jnp.sin(theta)
    R = jnp.stack([jnp.stack([cos_t, -sin_t], axis=-1),
                   jnp.stack([sin_t, cos_t], axis=-1)], axis=-2)  # (U, 2, 2)
    centered = grid[None] - mean[:, None, None, :]             # (U, H, W, 2)
    rotated = jnp.einsum("nhwi,nij->nhwj", centered, R)
    exponent = -0.5 * ((rotated / std[:, None, None, :]) ** 2).sum(-1)
    gm = jnp.exp(exponent)
    gm = gm / (gm.sum(axis=(-1, -2), keepdims=True) + 1e-8)
    return gm                                                  # (U, H, W)


def gaussian_readout_forward(x, weight, mask, bias=None, *,
                             mxu_dtype=jnp.bfloat16,
                             tp_max=4096,
                             num_u_blocks=1,
                             stream_vmem_budget=40 * 1024 * 1024):
    """GaussianReadout.forward.

    x:      (N, C, H, W)           (f32, or bf16 to halve HBM traffic)
    weight: (U, C, 1, 1) float32   (nn.Conv2d 1x1 weight)
    mask:   (U, H, W)    float32   (normalized Gaussian mask)
    bias:   optional (U,) float32  (module default bias=False -> None)
    num_u_blocks: set to 2 on v7x so the 'parallel' unit axis feeds both
                  TensorCores; keep 1 on v5e/v6e (single TC) so x is streamed
                  exactly once.
    returns (N, U)
    """
    N, C, H, W = x.shape
    U = weight.shape[0]
    P = H * W
    NC = N * C
    out_dtype = jnp.result_type(x.dtype, weight.dtype)

    # ---- unit-axis tiling ---------------------------------------------------
    if num_u_blocks <= 1:
        num_u_blocks = 1
        TU = _round_up(U, 8)              # block == full (padded) axis -> always legal
    else:
        # Multiple unit blocks must be 128-aligned so the lane-dense (N, TU)
        # output block satisfies the (8, 128) constraint.
        TU = _round_up(_cdiv(U, num_u_blocks), 128)
    U_pad = TU * num_u_blocks

    # ---- pixel-axis tiling (lane-dense, sized for bandwidth, VMEM-capped) ---
    x_item = jnp.dtype(x.dtype).itemsize
    m_item = jnp.dtype(mxu_dtype).itemsize
    TP = _round_up(min(P, tp_max), 128)
    per_col = 2 * (NC * x_item + TU * m_item)     # double-buffered bytes / pixel column
    tp_cap = max(128, (stream_vmem_budget // per_col) // 128 * 128)
    TP = min(TP, tp_cap)
    num_p_blocks = _cdiv(P, TP)
    P_pad = TP * num_p_blocks
    ragged = (P % TP) != 0                        # static: emit in-kernel masking only if needed

    # ---- operand prep (parameter-sized; x only gets a *free* reshape) -------
    x2d = x.reshape(NC, P)                                    # contiguous merge of (N, C)
    m2d = mask.reshape(U, P).astype(mxu_dtype)
    m2d = jnp.pad(m2d, ((0, U_pad - U), (0, P_pad - P)))      # tiny; zero rows/cols add nothing
    w2d = weight.reshape(U, C).astype(jnp.float32)
    w2d = jnp.pad(w2d, ((0, U_pad - U), (0, 0)))
    w_tiled = jnp.tile(w2d, (1, N))                           # (U_pad, NC): [u, n*C+c] = w[u, c]
    seg = jnp.repeat(jnp.eye(N, dtype=jnp.float32), C, axis=1)  # (N, NC): [n, n*C+c] = 1

    def kernel(m_ref, x_ref, w_ref, s_ref, o_ref, acc_ref):
        # m_ref:   (TU, TP)    Gaussian-mask tile (mxu_dtype)
        # x_ref:   (NC, TP)    batch-folded x pixel tile
        # w_ref:   (TU, NC)    conv weight tiled along batch (f32, resident per u-block)
        # s_ref:   (N,  NC)    constant segment-sum selector (f32, resident)
        # o_ref:   (N,  TU)    output block for this unit block
        # acc_ref: (TU, NC)    f32 accumulator: sum_p mask[u,p] * x[n*C+c, p]
        p = pl.program_id(1)

        @pl.when(p == 0)
        def _init():
            acc_ref[...] = jnp.zeros_like(acc_ref)

        x_t = x_ref[...]
        if ragged:
            # Last pixel tile overruns P: zero the out-of-range columns so
            # stale VMEM / OOB garbage (possibly NaN) can never contribute.
            col = lax.broadcasted_iota(jnp.int32, (1, TP), 1)
            x_t = jnp.where(col < (P - p * TP), x_t, jnp.zeros_like(x_t))
        x_t = x_t.astype(mxu_dtype)                        # bf16 MXU path, f32 accumulate

        # acc[u, nc] += sum_p m[u, p] * x[nc, p]
        acc_ref[...] += lax.dot_general(
            m_ref[...], x_t,
            dimension_numbers=(((1,), (1,)), ((), ())),
            preferred_element_type=jnp.float32,
        )

        @pl.when(p == pl.num_programs(1) - 1)
        def _finalize():
            # out[n, u] = sum_c w[u, c] * acc[u, n*C + c]
            #           = sum_k seg[n, k] * (acc * w_tiled)[u, k]
            res = lax.dot_general(
                s_ref[...], acc_ref[...] * w_ref[...],
                dimension_numbers=(((1,), (1,)), ((), ())),
                preferred_element_type=jnp.float32,
            )                                              # (N, TU)
            o_ref[...] = res.astype(o_ref.dtype)

    # ---- cost estimate & VMEM limit (actual traffic / footprint) ------------
    flops = 2 * U_pad * NC * P_pad + 2 * N * NC * U_pad
    bytes_accessed = (num_u_blocks * NC * P * x_item        # x, once per unit block
                      + U_pad * P_pad * m_item              # mask, once
                      + U_pad * NC * 4 + N * NC * 4         # tiled weight + selector
                      + N * U_pad * jnp.dtype(out_dtype).itemsize)
    cost = pl.CostEstimate(flops=int(flops), transcendentals=0,
                           bytes_accessed=int(bytes_accessed))

    footprint = (2 * NC * TP * x_item          # x tiles (double-buffered)
                 + 2 * TU * TP * m_item        # mask tiles
                 + 2 * TU * NC * 4             # tiled weight
                 + 2 * N * NC * 4              # selector
                 + 2 * N * TU * 4              # output block
                 + TU * NC * 4)                # accumulator scratch
    vmem_limit = max(16 * 1024 * 1024,
                     min(48 * 1024 * 1024, 2 * footprint + (4 << 20)))

    out = pl.pallas_call(
        kernel,
        out_shape=jax.ShapeDtypeStruct((N, U_pad), out_dtype),
        grid=(num_u_blocks, num_p_blocks),
        in_specs=[
            pl.BlockSpec((TU, TP), lambda u, p: (u, p)),   # mask tile
            pl.BlockSpec((NC, TP), lambda u, p: (0, p)),   # x tile (batch folded)
            pl.BlockSpec((TU, NC), lambda u, p: (u, 0)),   # tiled conv weight (resident)
            pl.BlockSpec((N, NC), lambda u, p: (0, 0)),    # segment-sum selector (resident)
        ],
        out_specs=pl.BlockSpec((N, TU), lambda u, p: (0, u)),
        scratch_shapes=[pltpu.VMEM((TU, NC), jnp.float32)],
        compiler_params=pltpu.CompilerParams(
            dimension_semantics=("parallel", "arbitrary"),
            vmem_limit_bytes=int(vmem_limit),
        ),
        cost_estimate=cost,
    )(m2d, x2d, w_tiled, seg)

    out = out[:, :U]                            # strip unit padding
    if bias is not None:
        out = out + bias[None, :].astype(out.dtype)
    return out


if __name__ == "__main__":
    # Small shapes consistent with the module: dims = (C, H, W), n_units = U.
    N, C, H, W = 2, 4, 16, 16
    U = 8

    key = jax.random.PRNGKey(0)
    kx, kw = jax.random.split(key)

    x = jax.random.normal(kx, (N, C, H, W), dtype=jnp.float32)

    # nn.Conv2d default init: U(-1/sqrt(fan_in), 1/sqrt(fan_in)).
    bound = 1.0 / math.sqrt(C)
    weight = jax.random.uniform(kw, (U, C, 1, 1), dtype=jnp.float32,
                                minval=-bound, maxval=bound)

    # GaussianReadout.__init__ parameter init (default bias=False -> no bias).
    center = (H / 2.0, W / 2.0)
    mean = jnp.tile(jnp.array([[center[0], center[1]]], dtype=jnp.float32), (U, 1))
    radius = min(H, W) / 4.0
    std = jnp.ones((U, 2), dtype=jnp.float32) * (radius * 0.3)
    theta = jnp.zeros((U,), dtype=jnp.float32)

    mask = compute_gaussian_mask(mean, std, theta, H, W)       # (U, H, W)

    out = gaussian_readout_forward(x, weight, mask)
    out = jax.block_until_ready(out)
    assert out.shape == (N, U)

    # Reference 1 (matched precision): same bf16-rounded streamed operands,
    # f32 accumulation -> isolates kernel-math correctness from bf16 rounding.
    w2d = weight.reshape(U, C)
    x_b = x.astype(jnp.bfloat16).astype(jnp.float32)
    m_b = mask.astype(jnp.bfloat16).astype(jnp.float32)
    ref_matched = jnp.einsum("ncp,uc,up->nu",
                             x_b.reshape(N, C, H * W), w2d,
                             m_b.reshape(U, H * W))
    assert jnp.allclose(out, ref_matched, atol=1e-3, rtol=1e-3), \
        float(jnp.abs(out - ref_matched).max())

    # Reference 2 (PyTorch forward semantics, full f32): loose tolerance
    # reflects the bf16 MXU streaming of x and the Gaussian mask.
    feat = jnp.einsum("nchw,uc->nuhw", x, w2d)
    ref = (feat * mask[None]).sum(axis=(-2, -1))
    assert jnp.allclose(out, ref, atol=3e-2, rtol=3e-2), \
        float(jnp.abs(out - ref).max())

    print("KERNEL_OK")
</pallas_src>

<mosaic_0001>
module attributes {stable_mosaic.version = 11 : i64} {
  func.func @kernel(%arg0: i32, %arg1: i32, %arg2: memref<8x256xbf16, #tpu.memory_space<vmem>>, %arg3: memref<8x256xf32, #tpu.memory_space<vmem>>, %arg4: memref<8x8xf32, #tpu.memory_space<vmem>>, %arg5: memref<2x8xf32, #tpu.memory_space<vmem>>, %arg6: memref<2x8xf32, #tpu.memory_space<vmem>>, %arg7: memref<8x8xf32, #tpu.memory_space<vmem>>) attributes {dimension_semantics = [#tpu.dimension_semantics<parallel>, #tpu.dimension_semantics<arbitrary>], iteration_bounds = array<i64: 1, 1>, scalar_prefetch = 0 : i64, scratch_operands = 1 : i64, tpu.core_type = #tpu.core_type<tc>, window_params = [{transform_indices = @transform_0, window_bounds = array<i64: 8, 256>}, {transform_indices = @transform_1, window_bounds = array<i64: 8, 256>}, {transform_indices = @transform_2, window_bounds = array<i64: 8, 8>}, {pipeline_mode = #tpu.pipeline_mode<synchronous>, transform_indices = @transform_3, window_bounds = array<i64: 2, 8>}, {transform_indices = @transform_4, window_bounds = array<i64: 2, 8>}]} {
    %c0_i32 = arith.constant 0 : i32
    %0 = arith.cmpi eq, %arg1, %c0_i32 : i32
    %1 = arith.extui %0 : i1 to i32
    %c0_i32_0 = arith.constant 0 : i32
    %2 = arith.cmpi ne, %1, %c0_i32_0 : i32
    scf.if %2 {
      %cst_10 = arith.constant 0.000000e+00 : f32
      %13 = vector.broadcast %cst_10 : f32 to vector<8x8xf32>
      %c0_11 = arith.constant 0 : index
      %c0_12 = arith.constant 0 : index
      %14 = vector.load %arg7[%c0_11, %c0_12] : memref<8x8xf32, #tpu.memory_space<vmem>>, vector<8x8xf32>
      tpu.vector_store %arg7[%c0_11, %c0_12], %13 {strides = array<i32>} : memref<8x8xf32, #tpu.memory_space<vmem>>, vector<8x8xf32>,
    } else {
    }
    %c0 = arith.constant 0 : index
    %c0_1 = arith.constant 0 : index
    %3 = vector.load %arg3[%c0, %c0_1] : memref<8x256xf32, #tpu.memory_space<vmem>>, vector<8x256xf32>
    %4 = arith.truncf %3 : vector<8x256xf32> to vector<8x256xbf16>
    %c0_2 = arith.constant 0 : index
    %c0_3 = arith.constant 0 : index
    %5 = vector.load %arg7[%c0_2, %c0_3] : memref<8x8xf32, #tpu.memory_space<vmem>>, vector<8x8xf32>
    %c0_4 = arith.constant 0 : index
    %c0_5 = arith.constant 0 : index
    %6 = vector.load %arg2[%c0_4, %c0_5] : memref<8x256xbf16, #tpu.memory_space<vmem>>, vector<8x256xbf16>
    %cst = arith.constant dense<0.000000e+00> : vector<8x8xf32>
    %7 = tpu.matmul %6, %4, %cst {dimension_numbers = #tpu.dot_dimension_numbers<[1], [1], [0], [0], [0, 0, 1, 0], [], []>} : vector<8x256xbf16>, vector<8x256xbf16>, vector<8x8xf32> -> vector<8x8xf32>
    %8 = arith.addf %5, %7 : vector<8x8xf32>
    %c0_6 = arith.constant 0 : index
    %c0_7 = arith.constant 0 : index
    %9 = vector.load %arg7[%c0_6, %c0_7] : memref<8x8xf32, #tpu.memory_space<vmem>>, vector<8x8xf32>
    tpu.vector_store %arg7[%c0_6, %c0_7], %8 {strides = array<i32>} : memref<8x8xf32, #tpu.memory_space<vmem>>, vector<8x8xf32>,
    %c0_i32_8 = arith.constant 0 : i32
    %10 = arith.cmpi eq, %arg1, %c0_i32_8 : i32
    %11 = arith.extui %10 : i1 to i32
    %c0_i32_9 = arith.constant 0 : i32
    %12 = arith.cmpi ne, %11, %c0_i32_9 : i32
    scf.if %12 {
      %c0_10 = arith.constant 0 : index
      %c0_11 = arith.constant 0 : index
      %13 = vector.load %arg5[%c0_10, %c0_11] : memref<2x8xf32, #tpu.memory_space<vmem>>, vector<2x8xf32>
      %c0_12 = arith.constant 0 : index
      %c0_13 = arith.constant 0 : index
      %14 = vector.load %arg7[%c0_12, %c0_13] : memref<8x8xf32, #tpu.memory_space<vmem>>, vector<8x8xf32>
      %c0_14 = arith.constant 0 : index
      %c0_15 = arith.constant 0 : index
      %15 = vector.load %arg4[%c0_14, %c0_15] : memref<8x8xf32, #tpu.memory_space<vmem>>, vector<8x8xf32>
      %16 = arith.mulf %14, %15 : vector<8x8xf32>
      %cst_16 = arith.constant dense<0.000000e+00> : vector<2x8xf32>
      %17 = tpu.matmul %13, %16, %cst_16 {dimension_numbers = #tpu.dot_dimension_numbers<[1], [1], [0], [0], [0, 0, 1, 0], [], []>} : vector<2x8xf32>, vector<8x8xf32>, vector<2x8xf32> -> vector<2x8xf32>
      %c0_17 = arith.constant 0 : index
      %c0_18 = arith.constant 0 : index
      %18 = vector.load %arg6[%c0_17, %c0_18] : memref<2x8xf32, #tpu.memory_space<vmem>>, vector<2x8xf32>
      tpu.vector_store %arg6[%c0_17, %c0_18], %17 {strides = array<i32>} : memref<2x8xf32, #tpu.memory_space<vmem>>, vector<2x8xf32>,
    } else {
    }
    return
  }
  func.func @transform_0(%arg0: i32, %arg1: i32) -> (i32, i32) {
    %c0_i32 = arith.constant 0 : i32
    return %arg0, %arg1 : i32, i32
  }
  func.func @transform_1(%arg0: i32, %arg1: i32) -> (i32, i32) {
    %c0_i32 = arith.constant 0 : i32
    %c0_i32_0 = arith.constant 0 : i32
    return %c0_i32, %arg1 : i32, i32
  }
  func.func @transform_2(%arg0: i32, %arg1: i32) -> (i32, i32) {
    %c0_i32 = arith.constant 0 : i32
    %c0_i32_0 = arith.constant 0 : i32
    return %arg0, %c0_i32 : i32, i32
  }
  func.func @transform_3(%arg0: i32, %arg1: i32) -> (i32, i32) {
    %c0_i32 = arith.constant 0 : i32
    %c0_i32_0 = arith.constant 0 : i32
    %c0_i32_1 = arith.constant 0 : i32
    return %c0_i32, %c0_i32_0 : i32, i32
  }
  func.func @transform_4(%arg0: i32, %arg1: i32) -> (i32, i32) {
    %c0_i32 = arith.constant 0 : i32
    %c0_i32_0 = arith.constant 0 : i32
    return %c0_i32, %arg0 : i32, i32
  }
}

</mosaic_0001>

<llo_original>
// kernel: tpu_custom_call.1
$region0: #{tpu_custom_call.1}
  #allocation0 [shape = 'u32[]', space=smem, size = 0x4, offset = 0x4, fixed_abs, tag = 'smem constant byte address 0x4 - core index']
  #allocation1 [shape = 'u32[144,128]{1,0:T(1,128)}', space=vmem, size = 0x12000, scoped, tag = 'internal scratch']
  #allocation2 [shape = 'f32[8,8]{1,0:T(8,128)}', space=vmem, size = 0x1000, scoped, tag = 'scratch operand']
  %s0 = inlined_call_operand.hbm [shape: bf16[8,256], index: 0, kind: input, shape index: {}]
  %s1 = inlined_call_operand.hbm [shape: f32[8,256], index: 1, kind: input, shape index: {}]
  %s2 = inlined_call_operand.hbm [shape: f32[8,8], index: 2, kind: input, shape index: {}]
  %s3 = inlined_call_operand.vmem [shape: f32[2,8], index: 3, kind: input, shape index: {}]
  %s4 = inlined_call_operand.hbm [shape: f32[2,8], index: 4, kind: output, shape index: {}]
  %s5 = sld [smem:[#allocation0]]
  $region46: #{tpu_custom_call.1} parent=0
    _
  %s7 = ssub.s32 1, %s5
  %s8 = scalar_select 0, %s7, %s5
  $region1: #{tpu_custom_call.1} parent=0
    #allocation3 [shape = 'u8[4096]{0}', space=vmem, size = 0x1000, scoped, tag = 'input window, operand 0, single buffered']
    #allocation4 [shape = 's32[1]{0}', space=sflag, size = 0x4, scoped, tag = 'scoped memory for tpu_custom_call.1']
    #allocation5 [shape = 's32[1]{0}', space=sflag, size = 0x4, scoped, tag = 'scoped memory for tpu_custom_call.1']
    #allocation6 [shape = 'u8[8192]{0}', space=vmem, size = 0x2000, scoped, tag = 'input window, operand 1, single buffered']
    #allocation7 [shape = 's32[1]{0}', space=sflag, size = 0x4, scoped, tag = 'scoped memory for tpu_custom_call.1']
    #allocation8 [shape = 'u8[4096]{0}', space=vmem, size = 0x1000, scoped, tag = 'input window, operand 2, single buffered']
    #allocation9 [shape = 'u8[1024]{0}', space=vmem, size = 0x400, scoped, tag = 'output window, operand 0, single buffered']
    %9 = vsyncpa [#allocation4], 0
    %10 = vsyncpa [#allocation7], 0
    %11 = vsyncpa [#allocation5], 0
    // Predicated region
    $region2: #{tpu_custom_call.1} parent=1 // pred_check
      _
    $region3: #{tpu_custom_call.1} parent=1 // pred_check_branch
      %13 = sbr.rel (0) target = $region5
    $region4: #{tpu_custom_call.1} parent=1 // pred_region
      %s15 = ssub.s32 128, 128
      %16 = vsyncadd [#allocation4], %s15
      %s18 = sshll.u32 [#allocation3], 4
      %s19 = int_to_ptr.vmem [resolvable:$true] %s18
      %21 = dma.hbm_to_vmem [thread:$0]  %s0, 128, %s19, [#allocation4]
    $region5: #{tpu_custom_call.1} parent=1 // pred_fallthru
      _
    // Predicated region
    $region6: #{tpu_custom_call.1} parent=1 // pred_check
      _
    $region7: #{tpu_custom_call.1} parent=1 // pred_check_branch
      %23 = sbr.rel (0) target = $region9
    $region8: #{tpu_custom_call.1} parent=1 // pred_region
      %s25 = ssub.s32 256, 256
      %26 = vsyncadd [#allocation7], %s25
      %s28 = sshll.u32 [#allocation6], 4
      %s29 = int_to_ptr.vmem [resolvable:$true] %s28
      %31 = dma.hbm_to_vmem [thread:$0]  %s1, 256, %s29, [#allocation7]
    $region9: #{tpu_custom_call.1} parent=1 // pred_fallthru
      _
    // Predicated region
    $region10: #{tpu_custom_call.1} parent=1 // pred_check
      _
    $region11: #{tpu_custom_call.1} parent=1 // pred_check_branch
      %33 = sbr.rel (0) target = $region13
    $region12: #{tpu_custom_call.1} parent=1 // pred_region
      %s35 = ssub.s32 128, 128
      %36 = vsyncadd [#allocation7], %s35
      %s38 = sshll.u32 [#allocation8], 4
      %s39 = int_to_ptr.vmem [resolvable:$true] %s38
      %41 = dma.hbm_to_vmem [thread:$0]  %s2, 128, %s39, [#allocation7]
    $region13: #{tpu_custom_call.1} parent=1 // pred_fallthru
      _
    // Predicated region
    $region14: #{tpu_custom_call.1} parent=1 // pred_check
      _
    $region15: #{tpu_custom_call.1} parent=1 // pred_check_branch
      %43 = sbr.rel (0) target = $region17
    $region16: #{tpu_custom_call.1} parent=1 // pred_region
      _
    $region17: #{tpu_custom_call.1} parent=1 // pred_fallthru
      _
    // Predicated region
    $region18: #{tpu_custom_call.1} parent=1 // pred_check
      _
    $region19: #{tpu_custom_call.1} parent=1 // pred_check_branch
      %45 = sbr.rel (0) target = $region21
    $region20: #{tpu_custom_call.1} parent=1 // pred_region
      %46 = dma.done [#allocation4], 128
    $region21: #{tpu_custom_call.1} parent=1 // pred_fallthru
      _
    // Predicated region
    $region22: #{tpu_custom_call.1} parent=1 // pred_check
      _
    $region23: #{tpu_custom_call.1} parent=1 // pred_check_branch
      %48 = sbr.rel (0) target = $region25
    $region24: #{tpu_custom_call.1} parent=1 // pred_region
      %49 = dma.done [#allocation7], 256
    $region25: #{tpu_custom_call.1} parent=1 // pred_fallthru
      _
    // Predicated region
    $region26: #{tpu_custom_call.1} parent=1 // pred_check
      _
    $region27: #{tpu_custom_call.1} parent=1 // pred_check_branch
      %51 = sbr.rel (0) target = $region29
    $region28: #{tpu_custom_call.1} parent=1 // pred_region
      %52 = dma.done [#allocation7], 128
    $region29: #{tpu_custom_call.1} parent=1 // pred_fallthru
      _
    %p54 = scmp.eq.s32.totalorder 0, 0
    // Predicated region
    $region30: #{tpu_custom_call.1} parent=1 // pred_check
      %p55 = pneg %p54
    $region31: #{tpu_custom_call.1} parent=1 // pred_check_branch
      %57 = sbr.rel (%p55) target = $region33
    $region32: #{tpu_custom_call.1} parent=1 // pred_region
      %vm58 = vcmask 64512
      %59 = vst.msk [vmem:[#allocation2] sm:$0xff] %vm58, 0.0
    $region33: #{tpu_custom_call.1} parent=1 // pred_fallthru
      _
    %v60 = vld [vmem:[#allocation6] sm:$0xff]
    %v61 = vld [vmem:[#allocation6 + $0x8] sm:$0xff]
    %v62 = vpack.c.bf16 %v60, %v60
    %v63 = vpack.c.bf16 %v61, %v61
    %v64 = vld [vmem:[#allocation2] sm:$0xff]
    %v65 = vld [vmem:[#allocation3] sm:$0xff]
    %v67 = vunpack.c.l.b16 %v65
    %v68 = vunpack.c.h.b16 %v65
    %v69 = vpack.c.b16 %v67, %v67
    %v70 = vpack.c.b16 %v68, %v68
    %73 = vmatprep.subr.bf16.mxu0 %v63
    %74 = vmatpush1.bf16.xpose.msra.mxu0 %v62
    %75 = vmatprep.subr.bf16.mxu0 0
    %76 = vmatpush1.bf16.xpose.msra.mxu0 0
    %77 = vmatprep.subr.bf16.mxu0 0
    %78 = vmatpush1.bf16.xpose.msra.mxu0 0
    %79 = vmatprep.subr.bf16.mxu0 0
    %80 = vmatpush1.bf16.xpose.msra.mxu0 0
    %81 = vmatprep.subr.bf16.mxu0 0
    %82 = vmatpush1.bf16.xpose.msra.mxu0 0
    %83 = vmatprep.subr.bf16.mxu0 0
    %84 = vmatpush1.bf16.xpose.msra.mxu0 0
    %85 = vmatprep.subr.bf16.mxu0 0
    %86 = vmatpush1.bf16.xpose.msra.mxu0 0
    %87 = vmatprep.subr.bf16.mxu0 0
    %88 = vmatpush1.bf16.xpose.msra.mxu0 0
    %89 = vmatprep.subr.bf16.mxu0 0
    %90 = vmatpush1.bf16.xpose.msra.mxu0 0
    %91 = vmatprep.subr.bf16.mxu0 0
    %92 = vmatpush1.bf16.xpose.msra.mxu0 0
    %93 = vmatprep.subr.bf16.mxu0 0
    %94 = vmatpush1.bf16.xpose.msra.mxu0 0
    %95 = vmatprep.subr.bf16.mxu0 0
    %96 = vmatpush1.bf16.xpose.msra.mxu0 0
    %97 = vmatprep.subr.bf16.mxu0 0
    %98 = vmatpush1.bf16.xpose.msra.mxu0 0
    %99 = vmatprep.subr.bf16.mxu0 0
    %100 = vmatpush1.bf16.xpose.msra.mxu0 0
    %101 = vmatprep.subr.bf16.mxu0 0
    %102 = vmatpush1.bf16.xpose.msra.mxu0 0
    %103 = vmatprep.subr.bf16.mxu0 0
    %104 = vmatpush1.bf16.xpose.msra.mxu0 0
    %105 = vmatprep.mubr.bf16.mxu0 %v70
    %106 = vmatmul.mubr.bf16.gmra.mrb[0].mxu0 %v69
    %v107 = vpop.f32.mrb[0].mxu0
    %v108 = vadd.f32 0.0, %v107
    %v109 = vpop.f32.mrb[0].mxu0
    %v110 = vpop.f32.mrb[0].mxu0
    %v111 = vpop.f32.mrb[0].mxu0
    %112 = vdwg.mxu0
    %v113 = vadd.f32 %v64, %v108
    %vm114 = vcmask 64512
    %115 = vst.msk [vmem:[#allocation2] sm:$0xff] %vm114, %v113
    // Predicated region
    $region34: #{tpu_custom_call.1} parent=1 // pred_check
      %p116 = pneg %p54
    $region35: #{tpu_custom_call.1} parent=1 // pred_check_branch
      %118 = sbr.rel (%p116) target = $region37
    $region36: #{tpu_custom_call.1} parent=1 // pred_region
      %v119 = vld [vmem:[%s3] sm:$0x3]
      %v120 = vld [vmem:[#allocation2] sm:$0xff]
      %v121 = vld [vmem:[#allocation8] sm:$0xff]
      %v122 = vmul.f32 %v120, %v121
      %v124 = vsel %vm114, %v119, 0
      %v127 = vsel %vm114, %v122, 0
      %129 = vmatprep.subr.mxu0 0.0
      %130 = vmatpush1.xpose.msra.mxu0 %v127
      %131 = vmatprep.subr.mxu0 0.0
      %132 = vmatpush1.xpose.msra.mxu0 0.0
      %133 = vmatprep.subr.mxu0 0.0
      %134 = vmatpush1.xpose.msra.mxu0 0.0
      %135 = vmatprep.subr.mxu0 0.0
      %136 = vmatpush1.xpose.msra.mxu0 0.0
      %137 = vmatprep.subr.mxu0 0.0
      %138 = vmatpush1.xpose.msra.mxu0 0.0
      %139 = vmatprep.subr.mxu0 0.0
      %140 = vmatpush1.xpose.msra.mxu0 0.0
      %141 = vmatprep.subr.mxu0 0.0
      %142 = vmatpush1.xpose.msra.mxu0 0.0
      %143 = vmatprep.subr.mxu0 0.0
      %144 = vmatpush1.xpose.msra.mxu0 0.0
      %145 = vmatprep.subr.mxu0 0.0
      %146 = vmatpush1.xpose.msra.mxu0 0.0
      %147 = vmatprep.subr.mxu0 0.0
      %148 = vmatpush1.xpose.msra.mxu0 0.0
      %149 = vmatprep.subr.mxu0 0.0
      %150 = vmatpush1.xpose.msra.mxu0 0.0
      %151 = vmatprep.subr.mxu0 0.0
      %152 = vmatpush1.xpose.msra.mxu0 0.0
      %153 = vmatprep.subr.mxu0 0.0
      %154 = vmatpush1.xpose.msra.mxu0 0.0
      %155 = vmatprep.subr.mxu0 0.0
      %156 = vmatpush1.xpose.msra.mxu0 0.0
      %157 = vmatprep.subr.mxu0 0.0
      %158 = vmatpush1.xpose.msra.mxu0 0.0
      %159 = vmatprep.subr.mxu0 0.0
      %160 = vmatpush1.xpose.msra.mxu0 0.0
      %161 = vmatprep.subr.mxu0 0.0
      %162 = vmatpush1.xpose.msra.mxu0 0.0
      %163 = vmatprep.subr.mxu0 0.0
      %164 = vmatpush1.xpose.msra.mxu0 0.0
      %165 = vmatprep.subr.mxu0 0.0
      %166 = vmatpush1.xpose.msra.mxu0 0.0
      %167 = vmatprep.subr.mxu0 0.0
      %168 = vmatpush1.xpose.msra.mxu0 0.0
      %169 = vmatprep.subr.mxu0 0.0
      %170 = vmatpush1.xpose.msra.mxu0 0.0
      %171 = vmatprep.subr.mxu0 0.0
      %172 = vmatpush1.xpose.msra.mxu0 0.0
      %173 = vmatprep.subr.mxu0 0.0
      %174 = vmatpush1.xpose.msra.mxu0 0.0
      %175 = vmatprep.subr.mxu0 0.0
      %176 = vmatpush1.xpose.msra.mxu0 0.0
      %177 = vmatprep.subr.mxu0 0.0
      %178 = vmatpush1.xpose.msra.mxu0 0.0
      %179 = vmatprep.subr.mxu0 0.0
      %180 = vmatpush1.xpose.msra.mxu0 0.0
      %181 = vmatprep.subr.mxu0 0.0
      %182 = vmatpush1.xpose.msra.mxu0 0.0
      %183 = vmatprep.subr.mxu0 0.0
      %184 = vmatpush1.xpose.msra.mxu0 0.0
      %185 = vmatprep.subr.mxu0 0.0
      %186 = vmatpush1.xpose.msra.mxu0 0.0
      %187 = vmatprep.subr.mxu0 0.0
      %188 = vmatpush1.xpose.msra.mxu0 0.0
      %189 = vmatprep.subr.mxu0 0.0
      %190 = vmatpush1.xpose.msra.mxu0 0.0
      %191 = vmatprep.subr.mxu0 0.0
      %192 = vmatpush1.xpose.msra.mxu0 0.0
      %193 = vmatprep.mubr.f32.mxu0 0.0
      %194 = vmatmul.mubr.f32.gmra.mrb[0].mxu0 %v124
      %v195 = vpop.f32.mrb[0].mxu0
      %v196 = vadd.f32 0.0, %v195
      %v197 = vpop.f32.mrb[0].mxu0
      %198 = vdwg.mxu0
      %vm199 = vcmask 58368
      %200 = vst.msk [vmem:[#allocation9] sm:$0x3] %vm199, %v196
    $region37: #{tpu_custom_call.1} parent=1 // pred_fallthru
      _
    // Predicated region
    $region38: #{tpu_custom_call.1} parent=1 // pred_check
      _
    $region39: #{tpu_custom_call.1} parent=1 // pred_check_branch
      %202 = sbr.rel (0) target = $region41
    $region40: #{tpu_custom_call.1} parent=1 // pred_region
      %s204 = ssub.s32 32, 32
      %205 = vsyncadd [#allocation5], %s204
      %s207 = sshll.u32 [#allocation9], 4
      %s208 = int_to_ptr.vmem [resolvable:$true] %s207
      %210 = dma.vmem_to_hbm [thread:$0]  %s208, 32, %s4, [#allocation5]
    $region41: #{tpu_custom_call.1} parent=1 // pred_fallthru
      _
    // Predicated region
    $region42: #{tpu_custom_call.1} parent=1 // pred_check
      _
    $region43: #{tpu_custom_call.1} parent=1 // pred_check_branch
      %212 = sbr.rel (0) target = $region45
    $region44: #{tpu_custom_call.1} parent=1 // pred_region
      %213 = dma.done [#allocation5], 32
    $region45: #{tpu_custom_call.1} parent=1 // pred_fallthru
      _
    %214 = vsyncpa [#allocation4], 1
    %215 = vsyncpa [#allocation7], 1
    %216 = vsyncpa [#allocation5], 1

</llo_original>
